<compile_context>
chip_gen: v5e
topology: v5e:2x2
jax: 0.10.0
libtpu: 0.0.40
codegen_flags: <defaults>
</compile_context>

<pallas_src>
import functools

import jax
import jax.numpy as jnp
from jax.experimental import pallas as pl
from jax.experimental.pallas import tpu as pltpu


def _round_up(x, m):
    return (x + m - 1) // m * m


def ffn_kernel(x_ref, w1_ref, b1_ref, w2_ref, b2_ref, g_ref, beta_ref,
               o_ref, acc_ref, *, d_valid):
    f = pl.program_id(1)
    nf = pl.num_programs(1)

    @pl.when(f == 0)
    def _():
        acc_ref[...] = jnp.zeros_like(acc_ref)

    # dense1 F-chunk (+bias, ReLU) in the input dtype on the MXU, f32 accum.
    x = x_ref[...]                                               # (TM, Dp)
    h = jnp.dot(x, w1_ref[...], preferred_element_type=jnp.float32)
    h = jnp.maximum(h + b1_ref[...].astype(jnp.float32), 0.0)    # (TM, tF)

    # dense2 F-chunk, accumulated over the F grid axis into f32 scratch.
    acc_ref[...] += jnp.dot(h.astype(x.dtype), w2_ref[...],
                            preferred_element_type=jnp.float32)

    @pl.when(f == nf - 1)
    def _():
        # bias2 + residual add in f32.
        z = (acc_ref[...] + b2_ref[...].astype(jnp.float32)
             + x_ref[...].astype(jnp.float32))                   # (TM, Dp) f32
        dp = z.shape[-1]
        if d_valid == dp:
            mean = jnp.mean(z, axis=-1, keepdims=True)
            zc = z - mean
            var = jnp.mean(zc * zc, axis=-1, keepdims=True)
        else:
            # Feature dim was padded to a lane-dense multiple of 128; reduce
            # only over the first d_valid (real) features.
            col = jax.lax.broadcasted_iota(jnp.int32, z.shape, 1)
            mask = (col < d_valid).astype(jnp.float32)
            inv_d = 1.0 / d_valid
            mean = jnp.sum(z * mask, axis=-1, keepdims=True) * inv_d
            zc = (z - mean) * mask
            var = jnp.sum(zc * zc, axis=-1, keepdims=True) * inv_d
        zhat = zc * jax.lax.rsqrt(var + 1e-5)
        out = (zhat * g_ref[...].astype(jnp.float32)
               + beta_ref[...].astype(jnp.float32))
        o_ref[...] = out.astype(o_ref.dtype)


def position_wise_ffn(x, w1, b1, w2, b2, gamma, beta, *,
                      tile_rows=256, tile_ffn=512):
    """x: (B, S, D); w1: (D, F); b1: (F,); w2: (F, D); b2: (D,); gamma/beta: (D,)."""
    B, S, D = x.shape
    F = w1.shape[1]
    N = B * S
    dtype = x.dtype
    itemsize = jnp.dtype(dtype).itemsize

    # Row tile: large enough to feed the MXU, multiple of 16 (bf16 sublane pack).
    tm = _round_up(min(tile_rows, N), 16)
    n_pad = _round_up(N, tm)

    # Lane-dense feature dims (multiples of 128); F tiled in tf-sized chunks.
    d_pad = _round_up(D, 128)
    tf = min(_round_up(tile_ffn, 128), _round_up(F, 128))
    f_pad = _round_up(F, tf)

    # Zero-pad everything. Padded rows/cols contribute exact zeros everywhere;
    # only the LayerNorm reduction needs masking (done in-kernel).
    x2d = jnp.pad(x.reshape(N, D), ((0, n_pad - N), (0, d_pad - D)))
    w1p = jnp.pad(w1.astype(dtype), ((0, d_pad - D), (0, f_pad - F)))
    b1p = jnp.pad(b1.astype(dtype), (0, f_pad - F)).reshape(1, f_pad)
    w2p = jnp.pad(w2.astype(dtype), ((0, f_pad - F), (0, d_pad - D)))
    b2p = jnp.pad(b2.astype(dtype), (0, d_pad - D)).reshape(1, d_pad)
    gp = jnp.pad(gamma.astype(dtype), (0, d_pad - D)).reshape(1, d_pad)
    bp = jnp.pad(beta.astype(dtype), (0, d_pad - D)).reshape(1, d_pad)

    grid = (n_pad // tm, f_pad // tf)

    # VMEM budget: double-buffered tiles + intermediates + f32 accumulator,
    # with 2x headroom; capped at 64 MiB so it is valid on v7x too.
    per_step = (2 * tm * d_pad * itemsize            # x tile
                + 2 * d_pad * tf * itemsize          # W1 chunk
                + 2 * tf * itemsize                  # b1 chunk
                + 2 * tf * d_pad * itemsize          # W2 chunk
                + 2 * 3 * d_pad * itemsize           # b2, gamma, beta
                + 2 * tm * d_pad * itemsize          # out tile
                + tm * tf * 4                        # h intermediate
                + tm * d_pad * 4)                    # f32 accumulator
    vmem_limit = int(min(max(2 * per_step, 32 * 1024 * 1024),
                         64 * 1024 * 1024))

    cost = pl.CostEstimate(
        flops=4 * N * D * F,
        transcendentals=N,
        bytes_accessed=(2 * N * D + 2 * D * F + F + 3 * D) * itemsize)

    kernel = functools.partial(ffn_kernel, d_valid=D)

    out2d = pl.pallas_call(
        kernel,
        out_shape=jax.ShapeDtypeStruct((n_pad, d_pad), dtype),
        grid_spec=pltpu.PrefetchScalarGridSpec(
            num_scalar_prefetch=0,
            grid=grid,
            in_specs=[
                pl.BlockSpec((tm, d_pad), lambda i, f: (i, 0)),   # x rows
                pl.BlockSpec((d_pad, tf), lambda i, f: (0, f)),   # W1 F-chunk
                pl.BlockSpec((1, tf), lambda i, f: (0, f)),       # b1 F-chunk
                pl.BlockSpec((tf, d_pad), lambda i, f: (f, 0)),   # W2 F-chunk
                pl.BlockSpec((1, d_pad), lambda i, f: (0, 0)),    # b2
                pl.BlockSpec((1, d_pad), lambda i, f: (0, 0)),    # gamma
                pl.BlockSpec((1, d_pad), lambda i, f: (0, 0)),    # beta
            ],
            out_specs=pl.BlockSpec((tm, d_pad), lambda i, f: (i, 0)),
            scratch_shapes=[pltpu.VMEM((tm, d_pad), jnp.float32)],
        ),
        compiler_params=pltpu.CompilerParams(
            dimension_semantics=("parallel", "arbitrary"),
            vmem_limit_bytes=vmem_limit),
        cost_estimate=cost,
    )(x2d, w1p, b1p, w2p, b2p, gp, bp)

    return out2d[:N, :D].reshape(B, S, D)


def reference(x, w1, b1, w2, b2, gamma, beta):
    h = jnp.maximum(x @ w1 + b1, 0.0)
    y = h @ w2 + b2
    z = y + x
    mean = jnp.mean(z, axis=-1, keepdims=True)
    var = jnp.mean((z - mean) ** 2, axis=-1, keepdims=True)
    return (z - mean) / jnp.sqrt(var + 1e-5) * gamma + beta


if __name__ == "__main__":
    # small shapes consistent with the module: batch=2, seq=8, num_hiddens=32, ffn_hiddens=64
    B, S, D, F = 2, 8, 32, 64
    key = jax.random.PRNGKey(0)
    kx, k1, k2, k3, k4 = jax.random.split(key, 5)

    x = jax.random.normal(kx, (B, S, D), dtype=jnp.float32)

    # deterministic parameter init (Linear weights stored as (in, out))
    w1 = jax.random.normal(k1, (D, F), dtype=jnp.float32) * (1.0 / jnp.sqrt(D))
    b1 = jax.random.normal(k2, (F,), dtype=jnp.float32) * 0.01
    w2 = jax.random.normal(k3, (F, D), dtype=jnp.float32) * (1.0 / jnp.sqrt(F))
    b2 = jax.random.normal(k4, (D,), dtype=jnp.float32) * 0.01
    gamma = jnp.ones((D,), dtype=jnp.float32)
    beta = jnp.zeros((D,), dtype=jnp.float32)

    out = position_wise_ffn(x, w1, b1, w2, b2, gamma, beta)
    out = jax.block_until_ready(out)

    ref = reference(x, w1, b1, w2, b2, gamma, beta)
    assert out.shape == (B, S, D)
    assert jnp.allclose(out, ref, atol=1e-4, rtol=1e-4), "mismatch vs reference"

    print("KERNEL_OK")
</pallas_src>

<mosaic_0001>
module attributes {stable_mosaic.version = 11 : i64} {
  func.func @ffn_kernel(%arg0: i32, %arg1: i32, %arg2: memref<16x128xf32, #tpu.memory_space<vmem>>, %arg3: memref<128x128xf32, #tpu.memory_space<vmem>>, %arg4: memref<1x128xf32, #tpu.memory_space<vmem>>, %arg5: memref<128x128xf32, #tpu.memory_space<vmem>>, %arg6: memref<1x128xf32, #tpu.memory_space<vmem>>, %arg7: memref<1x128xf32, #tpu.memory_space<vmem>>, %arg8: memref<1x128xf32, #tpu.memory_space<vmem>>, %arg9: memref<16x128xf32, #tpu.memory_space<vmem>>, %arg10: memref<16x128xf32, #tpu.memory_space<vmem>>) attributes {dimension_semantics = [#tpu.dimension_semantics<parallel>, #tpu.dimension_semantics<arbitrary>], iteration_bounds = array<i64: 1, 1>, scalar_prefetch = 0 : i64, scratch_operands = 1 : i64, tpu.core_type = #tpu.core_type<tc>, window_params = [{transform_indices = @transform_0, window_bounds = array<i64: 16, 128>}, {transform_indices = @transform_1, window_bounds = array<i64: 128, 128>}, {transform_indices = @transform_2, window_bounds = array<i64: 1, 128>}, {transform_indices = @transform_3, window_bounds = array<i64: 128, 128>}, {pipeline_mode = #tpu.pipeline_mode<synchronous>, transform_indices = @transform_4, window_bounds = array<i64: 1, 128>}, {pipeline_mode = #tpu.pipeline_mode<synchronous>, transform_indices = @transform_5, window_bounds = array<i64: 1, 128>}, {pipeline_mode = #tpu.pipeline_mode<synchronous>, transform_indices = @transform_6, window_bounds = array<i64: 1, 128>}, {transform_indices = @transform_7, window_bounds = array<i64: 16, 128>}]} {
    %c0_i32 = arith.constant 0 : i32
    %0 = arith.cmpi eq, %arg1, %c0_i32 : i32
    %1 = arith.extui %0 : i1 to i32
    %c0_i32_0 = arith.constant 0 : i32
    %2 = arith.cmpi ne, %1, %c0_i32_0 : i32
    scf.if %2 {
      %cst_16 = arith.constant 0.000000e+00 : f32
      %19 = vector.broadcast %cst_16 : f32 to vector<16x128xf32>
      %c0_17 = arith.constant 0 : index
      %c0_18 = arith.constant 0 : index
      %20 = vector.load %arg10[%c0_17, %c0_18] : memref<16x128xf32, #tpu.memory_space<vmem>>, vector<16x128xf32>
      tpu.vector_store %arg10[%c0_17, %c0_18], %19 {strides = array<i32>} : memref<16x128xf32, #tpu.memory_space<vmem>>, vector<16x128xf32>,
    } else {
    }
    %c0 = arith.constant 0 : index
    %c0_1 = arith.constant 0 : index
    %3 = vector.load %arg2[%c0, %c0_1] : memref<16x128xf32, #tpu.memory_space<vmem>>, vector<16x128xf32>
    %c0_2 = arith.constant 0 : index
    %c0_3 = arith.constant 0 : index
    %4 = vector.load %arg3[%c0_2, %c0_3] : memref<128x128xf32, #tpu.memory_space<vmem>>, vector<128x128xf32>
    %cst = arith.constant dense<0.000000e+00> : vector<16x128xf32>
    %5 = tpu.matmul %3, %4, %cst {dimension_numbers = #tpu.dot_dimension_numbers<[1], [0], [0], [1], [0, 0, 1, 1], [], []>} : vector<16x128xf32>, vector<128x128xf32>, vector<16x128xf32> -> vector<16x128xf32>
    %c0_4 = arith.constant 0 : index
    %c0_5 = arith.constant 0 : index
    %6 = vector.load %arg4[%c0_4, %c0_5] : memref<1x128xf32, #tpu.memory_space<vmem>>, vector<1x128xf32>
    %7 = vector.broadcast %6 : vector<1x128xf32> to vector<16x128xf32>
    %8 = arith.addf %5, %7 : vector<16x128xf32>
    %cst_6 = arith.constant 0.000000e+00 : f32
    %9 = vector.broadcast %cst_6 : f32 to vector<16x128xf32>
    %10 = arith.maximumf %8, %9 : vector<16x128xf32>
    %c0_7 = arith.constant 0 : index
    %c0_8 = arith.constant 0 : index
    %11 = vector.load %arg10[%c0_7, %c0_8] : memref<16x128xf32, #tpu.memory_space<vmem>>, vector<16x128xf32>
    %c0_9 = arith.constant 0 : index
    %c0_10 = arith.constant 0 : index
    %12 = vector.load %arg5[%c0_9, %c0_10] : memref<128x128xf32, #tpu.memory_space<vmem>>, vector<128x128xf32>
    %cst_11 = arith.constant dense<0.000000e+00> : vector<16x128xf32>
    %13 = tpu.matmul %10, %12, %cst_11 {dimension_numbers = #tpu.dot_dimension_numbers<[1], [0], [0], [1], [0, 0, 1, 1], [], []>} : vector<16x128xf32>, vector<128x128xf32>, vector<16x128xf32> -> vector<16x128xf32>
    %14 = arith.addf %11, %13 : vector<16x128xf32>
    %c0_12 = arith.constant 0 : index
    %c0_13 = arith.constant 0 : index
    %15 = vector.load %arg10[%c0_12, %c0_13] : memref<16x128xf32, #tpu.memory_space<vmem>>, vector<16x128xf32>
    tpu.vector_store %arg10[%c0_12, %c0_13], %14 {strides = array<i32>} : memref<16x128xf32, #tpu.memory_space<vmem>>, vector<16x128xf32>,
    %c0_i32_14 = arith.constant 0 : i32
    %16 = arith.cmpi eq, %arg1, %c0_i32_14 : i32
    %17 = arith.extui %16 : i1 to i32
    %c0_i32_15 = arith.constant 0 : i32
    %18 = arith.cmpi ne, %17, %c0_i32_15 : i32
    scf.if %18 {
      %c0_16 = arith.constant 0 : index
      %c0_17 = arith.constant 0 : index
      %19 = vector.load %arg10[%c0_16, %c0_17] : memref<16x128xf32, #tpu.memory_space<vmem>>, vector<16x128xf32>
      %c0_18 = arith.constant 0 : index
      %c0_19 = arith.constant 0 : index
      %20 = vector.load %arg6[%c0_18, %c0_19] : memref<1x128xf32, #tpu.memory_space<vmem>>, vector<1x128xf32>
      %21 = vector.broadcast %20 : vector<1x128xf32> to vector<16x128xf32>
      %22 = arith.addf %19, %21 : vector<16x128xf32>
      %c0_20 = arith.constant 0 : index
      %c0_21 = arith.constant 0 : index
      %23 = vector.load %arg2[%c0_20, %c0_21] : memref<16x128xf32, #tpu.memory_space<vmem>>, vector<16x128xf32>
      %24 = arith.addf %22, %23 : vector<16x128xf32>
      %25 = tpu.iota {dimensions = array<i32: 1>} : vector<16x128xi32>
      %c32_i32 = arith.constant 32 : i32
      %26 = vector.broadcast %c32_i32 : i32 to vector<16x128xi32>
      %27 = arith.cmpi slt, %25, %26 : vector<16x128xi32>
      %28 = arith.extui %27 : vector<16x128xi1> to vector<16x128xi32>
      %29 = arith.sitofp %28 : vector<16x128xi32> to vector<16x128xf32>
      %30 = arith.mulf %24, %29 : vector<16x128xf32>
      %cst_22 = arith.constant dense<0.000000e+00> : vector<16xf32>
      %31 = vector.multi_reduction <add>, %30, %cst_22 [1] : vector<16x128xf32> to vector<16xf32>
      %32 = vector.shape_cast %31 : vector<16xf32> to vector<16x1xf32>
      %cst_23 = arith.constant 3.125000e-02 : f32
      %33 = vector.broadcast %cst_23 : f32 to vector<16x1xf32>
      %34 = arith.mulf %32, %33 : vector<16x1xf32>
      %35 = vector.broadcast %34 : vector<16x1xf32> to vector<16x128xf32>
      %36 = arith.subf %24, %35 : vector<16x128xf32>
      %37 = arith.mulf %36, %29 : vector<16x128xf32>
      %38 = arith.mulf %37, %37 : vector<16x128xf32>
      %cst_24 = arith.constant dense<0.000000e+00> : vector<16xf32>
      %39 = vector.multi_reduction <add>, %38, %cst_24 [1] : vector<16x128xf32> to vector<16xf32>
      %40 = vector.shape_cast %39 : vector<16xf32> to vector<16x1xf32>
      %cst_25 = arith.constant 3.125000e-02 : f32
      %41 = vector.broadcast %cst_25 : f32 to vector<16x1xf32>
      %42 = arith.mulf %40, %41 : vector<16x1xf32>
      %cst_26 = arith.constant 9.99999974E-6 : f32
      %43 = vector.broadcast %cst_26 : f32 to vector<16x1xf32>
      %44 = arith.addf %42, %43 : vector<16x1xf32>
      %45 = math.rsqrt %44 : vector<16x1xf32>
      %46 = vector.broadcast %45 : vector<16x1xf32> to vector<16x128xf32>
      %47 = arith.mulf %37, %46 : vector<16x128xf32>
      %c0_27 = arith.constant 0 : index
      %c0_28 = arith.constant 0 : index
      %48 = vector.load %arg7[%c0_27, %c0_28] : memref<1x128xf32, #tpu.memory_space<vmem>>, vector<1x128xf32>
      %49 = vector.broadcast %48 : vector<1x128xf32> to vector<16x128xf32>
      %50 = arith.mulf %47, %49 : vector<16x128xf32>
      %c0_29 = arith.constant 0 : index
      %c0_30 = arith.constant 0 : index
      %51 = vector.load %arg8[%c0_29, %c0_30] : memref<1x128xf32, #tpu.memory_space<vmem>>, vector<1x128xf32>
      %52 = vector.broadcast %51 : vector<1x128xf32> to vector<16x128xf32>
      %53 = arith.addf %50, %52 : vector<16x128xf32>
      %c0_31 = arith.constant 0 : index
      %c0_32 = arith.constant 0 : index
      %54 = vector.load %arg9[%c0_31, %c0_32] : memref<16x128xf32, #tpu.memory_space<vmem>>, vector<16x128xf32>
      tpu.vector_store %arg9[%c0_31, %c0_32], %53 {strides = array<i32>} : memref<16x128xf32, #tpu.memory_space<vmem>>, vector<16x128xf32>,
    } else {
    }
    return
  }
  func.func @transform_0(%arg0: i32, %arg1: i32) -> (i32, i32) {
    %c0_i32 = arith.constant 0 : i32
    %c0_i32_0 = arith.constant 0 : i32
    return %arg0, %c0_i32 : i32, i32
  }
  func.func @transform_1(%arg0: i32, %arg1: i32) -> (i32, i32) {
    %c0_i32 = arith.constant 0 : i32
    %c0_i32_0 = arith.constant 0 : i32
    return %c0_i32, %arg1 : i32, i32
  }
  func.func @transform_2(%arg0: i32, %arg1: i32) -> (i32, i32) {
    %c0_i32 = arith.constant 0 : i32
    %c0_i32_0 = arith.constant 0 : i32
    return %c0_i32, %arg1 : i32, i32
  }
  func.func @transform_3(%arg0: i32, %arg1: i32) -> (i32, i32) {
    %c0_i32 = arith.constant 0 : i32
    %c0_i32_0 = arith.constant 0 : i32
    return %arg1, %c0_i32 : i32, i32
  }
  func.func @transform_4(%arg0: i32, %arg1: i32) -> (i32, i32) {
    %c0_i32 = arith.constant 0 : i32
    %c0_i32_0 = arith.constant 0 : i32
    %c0_i32_1 = arith.constant 0 : i32
    return %c0_i32, %c0_i32_0 : i32, i32
  }
  func.func @transform_5(%arg0: i32, %arg1: i32) -> (i32, i32) {
    %c0_i32 = arith.constant 0 : i32
    %c0_i32_0 = arith.constant 0 : i32
    %c0_i32_1 = arith.constant 0 : i32
    return %c0_i32, %c0_i32_0 : i32, i32
  }
  func.func @transform_6(%arg0: i32, %arg1: i32) -> (i32, i32) {
    %c0_i32 = arith.constant 0 : i32
    %c0_i32_0 = arith.constant 0 : i32
    %c0_i32_1 = arith.constant 0 : i32
    return %c0_i32, %c0_i32_0 : i32, i32
  }
  func.func @transform_7(%arg0: i32, %arg1: i32) -> (i32, i32) {
    %c0_i32 = arith.constant 0 : i32
    %c0_i32_0 = arith.constant 0 : i32
    return %arg0, %c0_i32 : i32, i32
  }
}

</mosaic_0001>

<llo_original>
// kernel: tpu_custom_call.1
$region0: #{tpu_custom_call.1}
  #allocation0 [shape = 'u32[]', space=smem, size = 0x4, offset = 0x4, fixed_abs, tag = 'smem constant byte address 0x4 - core index']
  #allocation1 [shape = 'u32[72,128]{1,0:T(1,128)}', space=vmem, size = 0x9000, scoped, tag = 'internal scratch']
  #allocation2 [shape = 'f32[16,128]{1,0:T(8,128)}', space=vmem, size = 0x2000, scoped, tag = 'scratch operand']
  %s0 = inlined_call_operand.hbm [shape: f32[16,128], index: 0, kind: input, shape index: {}]
  %s1 = inlined_call_operand.hbm [shape: f32[128,128], index: 1, kind: input, shape index: {}]
  %s2 = inlined_call_operand.vmem [shape: f32[1,128], index: 2, kind: input, shape index: {}]
  %s3 = inlined_call_operand.hbm [shape: f32[128,128], index: 3, kind: input, shape index: {}]
  %s4 = inlined_call_operand.vmem [shape: f32[1,128], index: 4, kind: input, shape index: {}]
  %s5 = inlined_call_operand.vmem [shape: f32[1,128], index: 5, kind: input, shape index: {}]
  %s6 = inlined_call_operand.vmem [shape: f32[1,128], index: 6, kind: input, shape index: {}]
  %s7 = inlined_call_operand.hbm [shape: f32[16,128], index: 7, kind: output, shape index: {}]
  %s8 = sld [smem:[#allocation0]]
  $region58: #{tpu_custom_call.1} parent=0
    _
  %s10 = ssub.s32 1, %s8
  %s11 = scalar_select 0, %s10, %s8
  $region1: #{tpu_custom_call.1} parent=0
    #allocation3 [shape = 'u8[8192]{0}', space=vmem, size = 0x2000, scoped, tag = 'input window, operand 0, single buffered']
    #allocation4 [shape = 's32[1]{0}', space=sflag, size = 0x4, scoped, tag = 'scoped memory for tpu_custom_call.1']
    #allocation5 [shape = 's32[1]{0}', space=sflag, size = 0x4, scoped, tag = 'scoped memory for tpu_custom_call.1']
    #allocation6 [shape = 'u8[65536]{0}', space=vmem, size = 0x10000, scoped, tag = 'input window, operand 1, single buffered']
    #allocation7 [shape = 's32[1]{0}', space=sflag, size = 0x4, scoped, tag = 'scoped memory for tpu_custom_call.1']
    #allocation8 [shape = 'u8[65536]{0}', space=vmem, size = 0x10000, scoped, tag = 'input window, operand 3, single buffered']
    #allocation9 [shape = 'u8[8192]{0}', space=vmem, size = 0x2000, scoped, tag = 'output window, operand 0, single buffered']
    %12 = vsyncpa [#allocation4], 0
    %13 = vsyncpa [#allocation7], 0
    %14 = vsyncpa [#allocation5], 0
    // Predicated region
    $region2: #{tpu_custom_call.1} parent=1 // pred_check
      _
    $region3: #{tpu_custom_call.1} parent=1 // pred_check_branch
      %16 = sbr.rel (0) target = $region5
    $region4: #{tpu_custom_call.1} parent=1 // pred_region
      %18 = vsyncadd [#allocation4], 0
      %s19 = sshll.u32 %s0, 4
      %s20 = int_to_ptr.hbm [resolvable:$true] %s19
      %s21 = sshll.u32 [#allocation3], 4
      %s22 = int_to_ptr.vmem [resolvable:$true] %s21
      %27 = dma.hbm_to_vmem [thread:$0]  %s20, 256, %s22, [#allocation4], 128, 128, 8
    $region5: #{tpu_custom_call.1} parent=1 // pred_fallthru
      _
    // Predicated region
    $region6: #{tpu_custom_call.1} parent=1 // pred_check
      _
    $region7: #{tpu_custom_call.1} parent=1 // pred_check_branch
      %29 = sbr.rel (0) target = $region9
    $region8: #{tpu_custom_call.1} parent=1 // pred_region
      %31 = vsyncadd [#allocation7], 0
      %s32 = sshll.u32 %s1, 4
      %s33 = int_to_ptr.hbm [resolvable:$true] %s32
      %s34 = sshll.u32 [#allocation6], 4
      %s35 = int_to_ptr.vmem [resolvable:$true] %s34
      %40 = dma.hbm_to_vmem [thread:$0]  %s33, 2048, %s35, [#allocation7], 128, 128, 8
    $region9: #{tpu_custom_call.1} parent=1 // pred_fallthru
      _
    // Predicated region
    $region10: #{tpu_custom_call.1} parent=1 // pred_check
      _
    $region11: #{tpu_custom_call.1} parent=1 // pred_check_branch
      %42 = sbr.rel (0) target = $region13
    $region12: #{tpu_custom_call.1} parent=1 // pred_region
      _
    $region13: #{tpu_custom_call.1} parent=1 // pred_fallthru
      _
    // Predicated region
    $region14: #{tpu_custom_call.1} parent=1 // pred_check
      _
    $region15: #{tpu_custom_call.1} parent=1 // pred_check_branch
      %44 = sbr.rel (0) target = $region17
    $region16: #{tpu_custom_call.1} parent=1 // pred_region
      %46 = vsyncadd [#allocation7], 0
      %s47 = sshll.u32 %s3, 4
      %s48 = int_to_ptr.hbm [resolvable:$true] %s47
      %s49 = sshll.u32 [#allocation8], 4
      %s50 = int_to_ptr.vmem [resolvable:$true] %s49
      %55 = dma.hbm_to_vmem [thread:$0]  %s48, 2048, %s50, [#allocation7], 128, 128, 8
    $region17: #{tpu_custom_call.1} parent=1 // pred_fallthru
      _
    // Predicated region
    $region18: #{tpu_custom_call.1} parent=1 // pred_check
      _
    $region19: #{tpu_custom_call.1} parent=1 // pred_check_branch
      %57 = sbr.rel (0) target = $region21
    $region20: #{tpu_custom_call.1} parent=1 // pred_region
      _
    $region21: #{tpu_custom_call.1} parent=1 // pred_fallthru
      _
    // Predicated region
    $region22: #{tpu_custom_call.1} parent=1 // pred_check
      _
    $region23: #{tpu_custom_call.1} parent=1 // pred_check_branch
      %59 = sbr.rel (0) target = $region25
    $region24: #{tpu_custom_call.1} parent=1 // pred_region
      _
    $region25: #{tpu_custom_call.1} parent=1 // pred_fallthru
      _
    // Predicated region
    $region26: #{tpu_custom_call.1} parent=1 // pred_check
      _
    $region27: #{tpu_custom_call.1} parent=1 // pred_check_branch
      %61 = sbr.rel (0) target = $region29
    $region28: #{tpu_custom_call.1} parent=1 // pred_region
      _
    $region29: #{tpu_custom_call.1} parent=1 // pred_fallthru
      _
    // Predicated region
    $region30: #{tpu_custom_call.1} parent=1 // pred_check
      _
    $region31: #{tpu_custom_call.1} parent=1 // pred_check_branch
      %63 = sbr.rel (0) target = $region33
    $region32: #{tpu_custom_call.1} parent=1 // pred_region
      %65 = dma.done [#allocation4], 256
    $region33: #{tpu_custom_call.1} parent=1 // pred_fallthru
      _
    // Predicated region
    $region34: #{tpu_custom_call.1} parent=1 // pred_check
      _
    $region35: #{tpu_custom_call.1} parent=1 // pred_check_branch
      %67 = sbr.rel (0) target = $region37
    $region36: #{tpu_custom_call.1} parent=1 // pred_region
      %69 = dma.done [#allocation7], 2048
    $region37: #{tpu_custom_call.1} parent=1 // pred_fallthru
      _
    // Predicated region
    $region38: #{tpu_custom_call.1} parent=1 // pred_check
      _
    $region39: #{tpu_custom_call.1} parent=1 // pred_check_branch
      %71 = sbr.rel (0) target = $region41
    $region40: #{tpu_custom_call.1} parent=1 // pred_region
      %73 = dma.done [#allocation7], 2048
    $region41: #{tpu_custom_call.1} parent=1 // pred_fallthru
      _
    %p74 = scmp.eq.s32.totalorder 0, 0
    // Predicated region
    $region42: #{tpu_custom_call.1} parent=1 // pred_check
      %p75 = pneg %p74
    $region43: #{tpu_custom_call.1} parent=1 // pred_check_branch
      %77 = sbr.rel (%p75) target = $region45
    $region44: #{tpu_custom_call.1} parent=1 // pred_region
      %78 = vst [vmem:[#allocation2] sm:$0xff] 0.0
      %79 = vst [vmem:[#allocation2 + $0x8] sm:$0xff] 0.0
    $region45: #{tpu_custom_call.1} parent=1 // pred_fallthru
      _
    %v80 = vld [vmem:[#allocation3] sm:$0xff]
    %v81 = vld [vmem:[#allocation3 + $0x8] sm:$0xff]
    %v82 = vld [vmem:[#allocation6] sm:$0xff]
    %v83 = vld [vmem:[#allocation6 + $0x8] sm:$0xff]
    %v84 = vld [vmem:[#allocation6 + $0x10] sm:$0xff]
    %v85 = vld [vmem:[#allocation6 + $0x18] sm:$0xff]
    %v86 = vld [vmem:[#allocation6 + $0x20] sm:$0xff]
    %v87 = vld [vmem:[#allocation6 + $0x28] sm:$0xff]
    %v88 = vld [vmem:[#allocation6 + $0x30] sm:$0xff]
    %v89 = vld [vmem:[#allocation6 + $0x38] sm:$0xff]
    %v90 = vld [vmem:[#allocation6 + $0x40] sm:$0xff]
    %v91 = vld [vmem:[#allocation6 + $0x48] sm:$0xff]
    %v92 = vld [vmem:[#allocation6 + $0x50] sm:$0xff]
    %v93 = vld [vmem:[#allocation6 + $0x58] sm:$0xff]
    %v94 = vld [vmem:[#allocation6 + $0x60] sm:$0xff]
    %v95 = vld [vmem:[#allocation6 + $0x68] sm:$0xff]
    %v96 = vld [vmem:[#allocation6 + $0x70] sm:$0xff]
    %v97 = vld [vmem:[#allocation6 + $0x78] sm:$0xff]
    %v98 = vld [vmem:[%s2] sm:$0x1]
    %v100 = vperm.slane %v98, 0
    %102 = vmatpush.msra.mxu0 %v97
    %103 = vmatpush.msra.mxu0 %v96
    %104 = vmatpush.msra.mxu0 %v95
    %105 = vmatpush.msra.mxu0 %v94
    %106 = vmatpush.msra.mxu0 %v93
    %107 = vmatpush.msra.mxu0 %v92
    %108 = vmatpush.msra.mxu0 %v91
    %109 = vmatpush.msra.mxu0 %v90
    %110 = vmatpush.msra.mxu0 %v89
    %111 = vmatpush.msra.mxu0 %v88
    %112 = vmatpush.msra.mxu0 %v87
    %113 = vmatpush.msra.mxu0 %v86
    %114 = vmatpush.msra.mxu0 %v85
    %115 = vmatpush.msra.mxu0 %v84
    %116 = vmatpush.msra.mxu0 %v83
    %117 = vmatpush.msra.mxu0 %v82
    %118 = vmatmul.f32.gmra.mxu0 %v80
    %v119 = vpop.f32.mrf.mxu0
    %v120 = vadd.f32 %v100, %v119
    %121 = vmatmul.f32.gmra.mxu0 %v81
    %v122 = vpop.f32.mrf.mxu0
    %v123 = vadd.f32 %v100, %v122
    %124 = vdwg.mxu0
    %v125 = vmax.f32 %v120, 0.0
    %v126 = vmax.f32 %v123, 0.0
    %v127 = vld [vmem:[#allocation2] sm:$0xff]
    %v128 = vld [vmem:[#allocation2 + $0x8] sm:$0xff]
    %v129 = vld [vmem:[#allocation8] sm:$0xff]
    %v130 = vld [vmem:[#allocation8 + $0x8] sm:$0xff]
    %v131 = vld [vmem:[#allocation8 + $0x10] sm:$0xff]
    %v132 = vld [vmem:[#allocation8 + $0x18] sm:$0xff]
    %v133 = vld [vmem:[#allocation8 + $0x20] sm:$0xff]
    %v134 = vld [vmem:[#allocation8 + $0x28] sm:$0xff]
    %v135 = vld [vmem:[#allocation8 + $0x30] sm:$0xff]
    %v136 = vld [vmem:[#allocation8 + $0x38] sm:$0xff]
    %v137 = vld [vmem:[#allocation8 + $0x40] sm:$0xff]
    %v138 = vld [vmem:[#allocation8 + $0x48] sm:$0xff]
    %v139 = vld [vmem:[#allocation8 + $0x50] sm:$0xff]
    %v140 = vld [vmem:[#allocation8 + $0x58] sm:$0xff]
    %v141 = vld [vmem:[#allocation8 + $0x60] sm:$0xff]
    %v142 = vld [vmem:[#allocation8 + $0x68] sm:$0xff]
    %v143 = vld [vmem:[#allocation8 + $0x70] sm:$0xff]
    %v144 = vld [vmem:[#allocation8 + $0x78] sm:$0xff]
    %145 = vmatpush.msra.mxu0 %v144
    %146 = vmatpush.msra.mxu0 %v143
    %147 = vmatpush.msra.mxu0 %v142
    %148 = vmatpush.msra.mxu0 %v141
    %149 = vmatpush.msra.mxu0 %v140
    %150 = vmatpush.msra.mxu0 %v139
    %151 = vmatpush.msra.mxu0 %v138
    %152 = vmatpush.msra.mxu0 %v137
    %153 = vmatpush.msra.mxu0 %v136
    %154 = vmatpush.msra.mxu0 %v135
    %155 = vmatpush.msra.mxu0 %v134
    %156 = vmatpush.msra.mxu0 %v133
    %157 = vmatpush.msra.mxu0 %v132
    %158 = vmatpush.msra.mxu0 %v131
    %159 = vmatpush.msra.mxu0 %v130
    %160 = vmatpush.msra.mxu0 %v129
    %161 = vmatmul.f32.gmra.mxu0 %v125
    %v162 = vpop.f32.mrf.mxu0
    %v163 = vadd.f32 0.0, %v162
    %164 = vmatmul.f32.gmra.mxu0 %v126
    %v165 = vpop.f32.mrf.mxu0
    %v166 = vadd.f32 0.0, %v165
    %167 = vdwg.mxu0
    %v168 = vadd.f32 %v127, %v163
    %v169 = vadd.f32 %v128, %v166
    %170 = vst [vmem:[#allocation2] sm:$0xff] %v168
    %171 = vst [vmem:[#allocation2 + $0x8] sm:$0xff] %v169
    // Predicated region
    $region46: #{tpu_custom_call.1} parent=1 // pred_check
      %p172 = pneg %p74
    $region47: #{tpu_custom_call.1} parent=1 // pred_check_branch
      %174 = sbr.rel (%p172) target = $region49
    $region48: #{tpu_custom_call.1} parent=1 // pred_region
      %v175 = vld [vmem:[#allocation2] sm:$0xff]
      %v176 = vld [vmem:[#allocation2 + $0x8] sm:$0xff]
      %v177 = vld [vmem:[%s4] sm:$0x1]
      %v179 = vperm.slane %v177, 0
      %v181 = vadd.f32 %v175, %v179
      %v182 = vadd.f32 %v176, %v179
      %v183 = vld [vmem:[#allocation3] sm:$0xff]
      %v184 = vld [vmem:[#allocation3 + $0x8] sm:$0xff]
      %v185 = vadd.f32 %v181, %v183
      %v186 = vadd.f32 %v182, %v184
      %v187 = vlaneseq
      %v188 = vand.u32 %v187, 127
      %vm189 = vcmp.lt.s32.totalorder %v188, 32
      %v190 = vsel %vm189, 1, 0
      %v191 = vcvt.s32.f32 %v190
      %v192 = vmul.f32 %v185, %v191
      %v193 = vmul.f32 %v186, %v191
      %194 = vadd.xlane.f32.xlu0 %v192
      %v195 = vpop.xlane.xlu0 %194
      %196 = vadd.xlane.f32.xlu0 %v193
      %v197 = vpop.xlane.xlu0 %196
      %v198 = vmul.f32 %v195, 0.03125
      %v199 = vmul.f32 %v197, 0.03125
      %v200 = vsub.f32 %v185, %v198
      %v201 = vsub.f32 %v186, %v199
      %v202 = vmul.f32 %v200, %v191
      %v203 = vmul.f32 %v201, %v191
      %v204 = vmul.f32 %v202, %v202
      %v205 = vmul.f32 %v203, %v203
      %206 = vadd.xlane.f32.xlu0 %v204
      %v207 = vpop.xlane.xlu0 %206
      %208 = vadd.xlane.f32.xlu0 %v205
      %v209 = vpop.xlane.xlu0 %208
      %v210 = vmul.f32 %v207, 0.03125
      %v211 = vmul.f32 %v209, 0.03125
      %v212 = vadd.f32 %v210, 1e-05
      %v213 = vadd.f32 %v211, 1e-05
      %v214 = vrsqrt.pop %v212
      %v215 = vmul.f32 %v214, %v212
      %v216 = vmul.f32 %v215, %v214
      %v217 = vmul.f32 0.5, %v216
      %v218 = vsub.f32 1.5, %v217
      %v219 = vmul.f32 %v214, %v218
      %vm220 = vweird.f32 %v212
      %vm221 = vweird.f32 %v214
      %vm222 = vmor %vm220, %vm221
      %v223 = vsel %vm222, %v214, %v219
      %v224 = vrsqrt.pop %v213
      %v225 = vmul.f32 %v224, %v213
      %v226 = vmul.f32 %v225, %v224
      %v227 = vmul.f32 0.5, %v226
      %v228 = vsub.f32 1.5, %v227
      %v229 = vmul.f32 %v224, %v228
      %vm230 = vweird.f32 %v213
      %vm231 = vweird.f32 %v224
      %vm232 = vmor %vm230, %vm231
      %v233 = vsel %vm232, %v224, %v229
      %v234 = vmul.f32 %v202, %v223
      %v235 = vmul.f32 %v203, %v233
      %v236 = vld [vmem:[%s5] sm:$0x1]
      %v238 = vperm.slane %v236, 0
      %v240 = vmul.f32 %v234, %v238
      %v241 = vmul.f32 %v235, %v238
      %v242 = vld [vmem:[%s6] sm:$0x1]
      %v244 = vperm.slane %v242, 0
      %v246 = vadd.f32 %v240, %v244
      %v247 = vadd.f32 %v241, %v244
      %248 = vst [vmem:[#allocation9] sm:$0xff] %v246
      %249 = vst [vmem:[#allocation9 + $0x8] sm:$0xff] %v247
    $region49: #{tpu_custom_call.1} parent=1 // pred_fallthru
      _
    // Predicated region
    $region50: #{tpu_custom_call.1} parent=1 // pred_check
      _
    $region51: #{tpu_custom_call.1} parent=1 // pred_check_branch
      %251 = sbr.rel (0) target = $region53
    $region52: #{tpu_custom_call.1} parent=1 // pred_region
      %253 = vsyncadd [#allocation5], 0
      %s254 = sshll.u32 [#allocation9], 4
      %s255 = int_to_ptr.vmem [resolvable:$true] %s254
      %s256 = sshll.u32 %s7, 4
      %s257 = int_to_ptr.hbm [resolvable:$true] %s256
      %262 = dma.vmem_to_hbm [thread:$0]  %s255, 256, %s257, [#allocation5], 128, 128, 8
    $region53: #{tpu_custom_call.1} parent=1 // pred_fallthru
      _
    // Predicated region
    $region54: #{tpu_custom_call.1} parent=1 // pred_check
      _
    $region55: #{tpu_custom_call.1} parent=1 // pred_check_branch
      %264 = sbr.rel (0) target = $region57
    $region56: #{tpu_custom_call.1} parent=1 // pred_region
      %266 = dma.done [#allocation5], 256
    $region57: #{tpu_custom_call.1} parent=1 // pred_fallthru
      _
    %267 = vsyncpa [#allocation4], 1
    %268 = vsyncpa [#allocation7], 1
    %269 = vsyncpa [#allocation5], 1

</llo_original>
